<compile_context>
chip_gen: v7x
topology: tpu7x:2x2x1
jax: 0.10.0
libtpu: 0.0.40
codegen_flags: <defaults>
</compile_context>

<pallas_src>
import math
import jax
import jax.numpy as jnp
from jax import lax
from jax.experimental import pallas as pl
from jax.experimental.pallas import tpu as pltpu


def _gelu_erf(x):
    # x * 0.5 * (1 + erf(x / sqrt(2)))  -- exact erf-based GELU (matches the torch version)
    return x * 0.5 * (1.0 + lax.erf(x * 0.7071067811865476))


def ffn_kernel(x_ref, w1_ref, b1_ref, w2_ref, b2_ref, o_ref, acc_ref):
    # x_ref : (C, TS)   input tile (one batch element, one spatial tile), f32
    # w1_ref: (TH, C)   bf16 chunk of fc1 weight (conv layout: out_ch x in_ch)
    # b1_ref: (TH, 1)   f32 chunk of fc1 bias
    # w2_ref: (C, TH)   bf16 chunk of fc2 weight
    # b2_ref: (C, 1)    f32 fc2 bias
    # o_ref : (C, TS)   output tile
    # acc_ref:(C, TS)   f32 accumulator across hidden (4C) chunks
    j = pl.program_id(2)

    @pl.when(j == 0)
    def _():
        acc_ref[...] = jnp.zeros_like(acc_ref)

    # bf16 into the MXU, f32 accumulation.
    x = x_ref[...].astype(jnp.bfloat16)
    h = jnp.dot(w1_ref[...], x, preferred_element_type=jnp.float32)      # (TH, TS)
    h = _gelu_erf(h + b1_ref[...])                                       # f32 elementwise
    acc_ref[...] += jnp.dot(w2_ref[...], h.astype(jnp.bfloat16),
                            preferred_element_type=jnp.float32)          # (C, TS)

    @pl.when(j == pl.num_programs(2) - 1)
    def _():
        o_ref[...] = (acc_ref[...] + b2_ref[...]).astype(o_ref.dtype)


def _pick_tile(dim, target, unit):
    """Largest tile <= target that divides `dim` and is a multiple of `unit`.
    Falls back to the full dim (a full-extent block is always layout-legal)."""
    if dim <= target:
        return dim
    t = (min(target, dim) // unit) * unit
    while t >= unit:
        if dim % t == 0:
            return t
        t -= unit
    return dim


def position_wise_feed_forward(x_nchw, w1, b1, w2, b2, *, tile_s=None, tile_h=None):
    """ALBERT position-wise FFN: fc2(gelu(fc1(x))) with 1x1 convs.

    x_nchw: (B, C, H, W) float32
    w1: (4C, C)  fc1 Conv2d weight with the 1x1 kernel dims squeezed   b1: (4C,)
    w2: (C, 4C)  fc2 Conv2d weight with the 1x1 kernel dims squeezed   b2: (C,)
    """
    B, C, H, W = x_nchw.shape
    C4 = w1.shape[0]
    assert w1.shape == (C4, C) and w2.shape == (C, C4)
    assert b1.shape == (C4,) and b2.shape == (C,)

    S = H * W
    # NCHW kept as-is: a 1x1 conv is a channel matmul with spatial on the lane axis,
    # so no HBM transpose round trips are needed.
    x3d = x_nchw.reshape(B, C, S)

    if tile_s is None:
        tile_s = _pick_tile(S, 512, 128)     # spatial (lane) tile
    if tile_h is None:
        tile_h = _pick_tile(C4, 512, 128)    # hidden (4C) chunk
    assert S % tile_s == 0, "spatial size H*W must be divisible by tile_s"
    assert C4 % tile_h == 0, "hidden size 4C must be divisible by tile_h"

    # Weights cast to bf16 once (MXU fast path, halves weight DMA); biases stay f32.
    w1_b = w1.astype(jnp.bfloat16)
    w2_b = w2.astype(jnp.bfloat16)
    b1_2d = b1.astype(jnp.float32).reshape(C4, 1)
    b2_2d = b2.astype(jnp.float32).reshape(C, 1)

    grid = (B, S // tile_s, C4 // tile_h)

    itemsize = x3d.dtype.itemsize
    cost = pl.CostEstimate(
        flops=4 * B * S * C * C4,              # two matmuls, 2 flops per MAC
        transcendentals=B * S * C4,            # one erf per hidden element
        bytes_accessed=(x3d.size * itemsize + B * C * S * itemsize
                        + w1_b.size * 2 + w2_b.size * 2
                        + b1_2d.size * 4 + b2_2d.size * 4),
    )

    out3d = pl.pallas_call(
        ffn_kernel,
        out_shape=jax.ShapeDtypeStruct((B, C, S), x_nchw.dtype),
        grid_spec=pltpu.PrefetchScalarGridSpec(
            num_scalar_prefetch=0,
            grid=grid,
            in_specs=[
                # x: one batch element, full channel extent, one spatial tile
                pl.BlockSpec((pl.Squeezed(), C, tile_s), lambda b, s, j: (b, 0, s)),
                # W1 chunk over the 4C (output) rows
                pl.BlockSpec((tile_h, C), lambda b, s, j: (j, 0)),
                # b1 chunk
                pl.BlockSpec((tile_h, 1), lambda b, s, j: (j, 0)),
                # W2 chunk over the 4C (contraction) columns
                pl.BlockSpec((C, tile_h), lambda b, s, j: (0, j)),
                # b2 (full)
                pl.BlockSpec((C, 1), lambda b, s, j: (0, 0)),
            ],
            out_specs=pl.BlockSpec((pl.Squeezed(), C, tile_s), lambda b, s, j: (b, 0, s)),
            scratch_shapes=[pltpu.VMEM((C, tile_s), jnp.float32)],
        ),
        compiler_params=pltpu.CompilerParams(
            # batch & spatial tiles are independent (megacore-shardable on v7x);
            # the 4C-chunk axis is the in-kernel reduction -> "arbitrary", last.
            dimension_semantics=("parallel", "parallel", "arbitrary"),
        ),
        cost_estimate=cost,
    )(x3d, w1_b, b1_2d, w2_b, b2_2d)

    return out3d.reshape(B, C, H, W)


def _xavier_uniform(key, shape):
    # shape = (out_ch, in_ch) conv-style weights
    fan_out, fan_in = shape
    limit = math.sqrt(6.0 / (fan_in + fan_out))
    return jax.random.uniform(key, shape, jnp.float32, -limit, limit)


if __name__ == "__main__":
    n_hidden = 4            # C
    B, H, W = 2, 16, 16     # input (B, C, H, W) = (2, 4, 16, 16)
    C, C4 = n_hidden, 4 * n_hidden

    key = jax.random.PRNGKey(0)
    kx, k1, k2, kb1, kb2 = jax.random.split(key, 5)

    x = jax.random.normal(kx, (B, C, H, W), jnp.float32)

    # Conv2d-layout parameters (out_ch, in_ch) with the 1x1 kernel dims squeezed.
    w1 = _xavier_uniform(k1, (C4, C))
    b1 = 0.01 * jax.random.normal(kb1, (C4,), jnp.float32)
    w2 = _xavier_uniform(k2, (C, C4))
    b2 = 0.01 * jax.random.normal(kb2, (C,), jnp.float32)

    out = position_wise_feed_forward(x, w1, b1, w2, b2)
    out = jax.block_until_ready(out)

    # Pure-JAX f32 reference (same math as the PyTorch module). The kernel feeds
    # the MXU bf16 inputs (f32 accumulation), so compare with a loose tolerance.
    x3 = x.reshape(B, C, H * W)
    h_ref = _gelu_erf(jnp.einsum("oc,bcs->bos", w1, x3) + b1[None, :, None])
    y_ref = jnp.einsum("co,bos->bcs", w2, h_ref) + b2[None, :, None]
    ref = y_ref.reshape(B, C, H, W)

    assert out.shape == (B, C, H, W)
    max_err = float(jnp.max(jnp.abs(out - ref)))
    assert jnp.allclose(out, ref, atol=3e-2, rtol=3e-2), f"max abs err {max_err}"

    print("KERNEL_OK")
</pallas_src>

<mosaic_0001>
module attributes {stable_mosaic.version = 11 : i64} {
  func.func @ffn_kernel(%arg0: i32, %arg1: i32, %arg2: i32, %arg3: memref<1x4x256xf32, #tpu.memory_space<vmem>>, %arg4: memref<16x4xbf16, #tpu.memory_space<vmem>>, %arg5: memref<16x1xf32, #tpu.memory_space<vmem>>, %arg6: memref<4x16xbf16, #tpu.memory_space<vmem>>, %arg7: memref<4x1xf32, #tpu.memory_space<vmem>>, %arg8: memref<1x4x256xf32, #tpu.memory_space<vmem>>, %arg9: memref<4x256xf32, #tpu.memory_space<vmem>>) attributes {dimension_semantics = [#tpu.dimension_semantics<parallel>, #tpu.dimension_semantics<parallel>, #tpu.dimension_semantics<arbitrary>], iteration_bounds = array<i64: 2, 1, 1>, scalar_prefetch = 0 : i64, scratch_operands = 1 : i64, tpu.core_type = #tpu.core_type<tc>, window_params = [{transform_indices = @transform_0, window_bounds = array<i64: 1, 4, 256>}, {transform_indices = @transform_1, window_bounds = array<i64: 16, 4>}, {transform_indices = @transform_2, window_bounds = array<i64: 16, 1>}, {transform_indices = @transform_3, window_bounds = array<i64: 4, 16>}, {pipeline_mode = #tpu.pipeline_mode<synchronous>, transform_indices = @transform_4, window_bounds = array<i64: 4, 1>}, {transform_indices = @transform_5, window_bounds = array<i64: 1, 4, 256>}]} {
    %c0_i32 = arith.constant 0 : i32
    %0 = arith.cmpi eq, %arg2, %c0_i32 : i32
    %1 = arith.extui %0 : i1 to i32
    %c0_i32_0 = arith.constant 0 : i32
    %2 = arith.cmpi ne, %1, %c0_i32_0 : i32
    scf.if %2 {
      %cst_19 = arith.constant 0.000000e+00 : f32
      %28 = vector.broadcast %cst_19 : f32 to vector<4x256xf32>
      %c0_20 = arith.constant 0 : index
      %c0_21 = arith.constant 0 : index
      %29 = vector.load %arg9[%c0_20, %c0_21] : memref<4x256xf32, #tpu.memory_space<vmem>>, vector<4x256xf32>
      tpu.vector_store %arg9[%c0_20, %c0_21], %28 {strides = array<i32>} : memref<4x256xf32, #tpu.memory_space<vmem>>, vector<4x256xf32>,
    } else {
    }
    %c0 = arith.constant 0 : index
    %c0_1 = arith.constant 0 : index
    %c0_2 = arith.constant 0 : index
    %3 = vector.load %arg3[%c0, %c0_1, %c0_2] : memref<1x4x256xf32, #tpu.memory_space<vmem>>, vector<1x4x256xf32>
    %4 = vector.shape_cast %3 : vector<1x4x256xf32> to vector<4x256xf32>
    %5 = arith.truncf %4 : vector<4x256xf32> to vector<4x256xbf16>
    %c0_3 = arith.constant 0 : index
    %c0_4 = arith.constant 0 : index
    %6 = vector.load %arg4[%c0_3, %c0_4] : memref<16x4xbf16, #tpu.memory_space<vmem>>, vector<16x4xbf16>
    %cst = arith.constant dense<0.000000e+00> : vector<16x256xf32>
    %7 = tpu.matmul %6, %5, %cst {dimension_numbers = #tpu.dot_dimension_numbers<[1], [0], [0], [1], [0, 0, 1, 1], [], []>} : vector<16x4xbf16>, vector<4x256xbf16>, vector<16x256xf32> -> vector<16x256xf32>
    %c0_5 = arith.constant 0 : index
    %c0_6 = arith.constant 0 : index
    %8 = vector.load %arg5[%c0_5, %c0_6] : memref<16x1xf32, #tpu.memory_space<vmem>>, vector<16x1xf32>
    %9 = vector.broadcast %8 : vector<16x1xf32> to vector<16x256xf32>
    %10 = arith.addf %7, %9 : vector<16x256xf32>
    %cst_7 = arith.constant 5.000000e-01 : f32
    %11 = vector.broadcast %cst_7 : f32 to vector<16x256xf32>
    %12 = arith.mulf %10, %11 : vector<16x256xf32>
    %cst_8 = arith.constant 0.707106769 : f32
    %13 = vector.broadcast %cst_8 : f32 to vector<16x256xf32>
    %14 = arith.mulf %10, %13 : vector<16x256xf32>
    %15 = math.erf %14 : vector<16x256xf32>
    %cst_9 = arith.constant 1.000000e+00 : f32
    %16 = vector.broadcast %cst_9 : f32 to vector<16x256xf32>
    %17 = arith.addf %16, %15 : vector<16x256xf32>
    %18 = arith.mulf %12, %17 : vector<16x256xf32>
    %c0_10 = arith.constant 0 : index
    %c0_11 = arith.constant 0 : index
    %19 = vector.load %arg9[%c0_10, %c0_11] : memref<4x256xf32, #tpu.memory_space<vmem>>, vector<4x256xf32>
    %c0_12 = arith.constant 0 : index
    %c0_13 = arith.constant 0 : index
    %20 = vector.load %arg6[%c0_12, %c0_13] : memref<4x16xbf16, #tpu.memory_space<vmem>>, vector<4x16xbf16>
    %21 = arith.truncf %18 : vector<16x256xf32> to vector<16x256xbf16>
    %cst_14 = arith.constant dense<0.000000e+00> : vector<4x256xf32>
    %22 = tpu.matmul %20, %21, %cst_14 {dimension_numbers = #tpu.dot_dimension_numbers<[1], [0], [0], [1], [0, 0, 1, 1], [], []>} : vector<4x16xbf16>, vector<16x256xbf16>, vector<4x256xf32> -> vector<4x256xf32>
    %23 = arith.addf %19, %22 : vector<4x256xf32>
    %c0_15 = arith.constant 0 : index
    %c0_16 = arith.constant 0 : index
    %24 = vector.load %arg9[%c0_15, %c0_16] : memref<4x256xf32, #tpu.memory_space<vmem>>, vector<4x256xf32>
    tpu.vector_store %arg9[%c0_15, %c0_16], %23 {strides = array<i32>} : memref<4x256xf32, #tpu.memory_space<vmem>>, vector<4x256xf32>,
    %c0_i32_17 = arith.constant 0 : i32
    %25 = arith.cmpi eq, %arg2, %c0_i32_17 : i32
    %26 = arith.extui %25 : i1 to i32
    %c0_i32_18 = arith.constant 0 : i32
    %27 = arith.cmpi ne, %26, %c0_i32_18 : i32
    scf.if %27 {
      %c0_19 = arith.constant 0 : index
      %c0_20 = arith.constant 0 : index
      %28 = vector.load %arg9[%c0_19, %c0_20] : memref<4x256xf32, #tpu.memory_space<vmem>>, vector<4x256xf32>
      %c0_21 = arith.constant 0 : index
      %c0_22 = arith.constant 0 : index
      %29 = vector.load %arg7[%c0_21, %c0_22] : memref<4x1xf32, #tpu.memory_space<vmem>>, vector<4x1xf32>
      %30 = vector.broadcast %29 : vector<4x1xf32> to vector<4x256xf32>
      %31 = arith.addf %28, %30 : vector<4x256xf32>
      %c0_23 = arith.constant 0 : index
      %c0_24 = arith.constant 0 : index
      %c0_25 = arith.constant 0 : index
      %32 = vector.load %arg8[%c0_23, %c0_24, %c0_25] : memref<1x4x256xf32, #tpu.memory_space<vmem>>, vector<1x4x256xf32>
      %33 = vector.shape_cast %32 : vector<1x4x256xf32> to vector<4x256xf32>
      %34 = vector.shape_cast %31 : vector<4x256xf32> to vector<1x4x256xf32>
      tpu.vector_store %arg8[%c0_23, %c0_24, %c0_25], %34 {strides = array<i32>} : memref<1x4x256xf32, #tpu.memory_space<vmem>>, vector<1x4x256xf32>,
    } else {
    }
    return
  }
  func.func @transform_0(%arg0: i32, %arg1: i32, %arg2: i32) -> (i32, i32, i32) {
    %c0_i32 = arith.constant 0 : i32
    %c0_i32_0 = arith.constant 0 : i32
    return %arg0, %c0_i32, %arg1 : i32, i32, i32
  }
  func.func @transform_1(%arg0: i32, %arg1: i32, %arg2: i32) -> (i32, i32) {
    %c0_i32 = arith.constant 0 : i32
    %c0_i32_0 = arith.constant 0 : i32
    return %arg2, %c0_i32 : i32, i32
  }
  func.func @transform_2(%arg0: i32, %arg1: i32, %arg2: i32) -> (i32, i32) {
    %c0_i32 = arith.constant 0 : i32
    %c0_i32_0 = arith.constant 0 : i32
    return %arg2, %c0_i32 : i32, i32
  }
  func.func @transform_3(%arg0: i32, %arg1: i32, %arg2: i32) -> (i32, i32) {
    %c0_i32 = arith.constant 0 : i32
    %c0_i32_0 = arith.constant 0 : i32
    return %c0_i32, %arg2 : i32, i32
  }
  func.func @transform_4(%arg0: i32, %arg1: i32, %arg2: i32) -> (i32, i32) {
    %c0_i32 = arith.constant 0 : i32
    %c0_i32_0 = arith.constant 0 : i32
    %c0_i32_1 = arith.constant 0 : i32
    return %c0_i32, %c0_i32_0 : i32, i32
  }
  func.func @transform_5(%arg0: i32, %arg1: i32, %arg2: i32) -> (i32, i32, i32) {
    %c0_i32 = arith.constant 0 : i32
    %c0_i32_0 = arith.constant 0 : i32
    return %arg0, %c0_i32, %arg1 : i32, i32, i32
  }
}

</mosaic_0001>

<llo_original>
// kernel: tpu_custom_call.1
$region0: #{tpu_custom_call.1}
  #allocation0 [shape = 'u32[]', space=smem, size = 0x4, offset = 0x4, fixed_abs, tag = 'smem constant byte address 0x4 - core index']
  #allocation1 [shape = 'u32[144,128]{1,0:T(1,128)}', space=vmem, size = 0x12000, scoped, tag = 'internal scratch']
  #allocation2 [shape = 'f32[4,256]{1,0:T(4,128)}', space=vmem, size = 0x1000, scoped, tag = 'scratch operand']
  %s0 = inlined_call_operand.vmem [shape: f32[2,4,256], index: 0, kind: input, shape index: {}]
  %s1 = inlined_call_operand.vmem [shape: bf16[16,4], index: 1, kind: input, shape index: {}]
  %s2 = inlined_call_operand.vmem [shape: f32[16,1], index: 2, kind: input, shape index: {}]
  %s3 = inlined_call_operand.vmem [shape: bf16[4,16], index: 3, kind: input, shape index: {}]
  %s4 = inlined_call_operand.vmem [shape: f32[4,1], index: 4, kind: input, shape index: {}]
  %s5 = inlined_call_operand.hbm [shape: f32[2,4,256], index: 5, kind: output, shape index: {}]
  %s6 = sld [smem:[#allocation0]]
  $region61: #{tpu_custom_call.1} parent=0
    _
  %s8 = ssub.s32 1, %s6
  %s9 = scalar_select 0, %s8, %s6
  $region1: #{tpu_custom_call.1} parent=0
    #allocation3 [shape = 'u8[8192]{0}', space=vmem, size = 0x2000, scoped, tag = 'output window, operand 0']
    #allocation4 [shape = 's32[2]{0}', space=sflag, size = 0x8, scoped, tag = 'scoped memory for tpu_custom_call.1']
    %10 = vsyncpa [#allocation4], 0
    %s11 = scalar_lea.sflag [#allocation4], 1
    %12 = vsyncpa %s11, 0
    loop: start=0, step=1, limit=4
    $region2: #{tpu_custom_call.1} parent=1 // loop_pre_header
      _
    $region3: #{tpu_custom_call.1} parent=1 // loop_header
      %s14 = sphi 0, %s18
      %p15 = scmp.ge.s32.totalorder %s14, 4
      %s21 = sphi 0, %s40
      %s22 = sphi 0, %s36
      %s23 = sphi 0, %s32
      %s24 = sphi 0, %s21
      %s25 = sphi 0, %s22
      %s26 = sphi 0, %s23
      %s27 = sphi 0, %s24
      %s28 = sphi 0, %s25
      %s29 = sphi 0, %s26
      %s45 = sphi 0, %s47
      %s48 = sphi 0, %s45
      %s49 = sphi 0, %s48
      %s65 = sphi 0, %s49
      %s71 = sphi 0, %s73
      %s74 = sphi 0, %s71
      %s75 = sphi 0, %s74
      %s91 = sphi 0, %s75
      %s97 = sphi 0, %s99
      %s100 = sphi 0, %s97
      %s101 = sphi 0, %s100
      %s117 = sphi 0, %s101
      %s123 = sphi 0, %s125
      %s126 = sphi 0, %s123
      %s127 = sphi 0, %s126
      %s143 = sphi 0, %s127
      %s147 = sphi 0, %s147
      %s149 = sphi 0, %s147
      %s150 = sphi 0, %s149
      %s164 = sphi 0, %s150
      %s172 = sphi 0, %s174
      %s175 = sphi 0, %s172
      %s176 = sphi 0, %s175
      %s192 = sphi 0, %s176
    $region4: #{tpu_custom_call.1} parent=1 // loop_header_branch
      %17 = sbr.rel (%p15) target = $region8
    $region5: #{tpu_custom_call.1} parent=1 // loop_body
      %s19 = ssub.s32 %s14, 1
      %s20 = ssub.s32 %s14, 2
      %s30 = sadd.s32 1, %s23
      %p31 = scmp.ge.s32.totalorder %s30, 1
      %s32 = scalar_select %p31, 0, %s30
      %s33 = sadd.s32 1, %s22
      %s34 = scalar_select %p31, %s33, %s22
      %p35 = scmp.ge.s32.totalorder %s34, 1
      %s36 = scalar_select %p35, 0, %s34
      %s37 = sadd.s32 1, %s21
      %s38 = scalar_select %p35, %s37, %s21
      %p39 = scmp.ge.s32.totalorder %s38, 2
      %s40 = scalar_select %p39, 0, %s38
      %s41 = ssub.s32 %s21, %s40
      %s42 = ssub.s32 %s22, %s36
      %s43 = sor.u32 %s41, %s42
      %p44 = scmp.eq.s32.totalorder %s43, 0
      %s46 = sadd.s32 %s45, 1
      %s47 = scalar_select %p44, %s45, %s46
      %p50 = pneg %p44
      %p51 = scmp.eq.s32.totalorder %s14, 1
      %p52 = por %p50, %p51
      %p53 = scmp.ne.s32.totalorder %s45, %s48
      %p54 = scmp.eq.s32.totalorder %s14, 0
      %p55 = por %p53, %p54
      %p56 = scmp.ne.s32.totalorder %s45, %s48
      %p57 = scmp.eq.s32.totalorder %s19, 1
      %p58 = por %p56, %p57
      %p59 = scmp.ne.s32.totalorder %s48, %s49
      %p60 = scmp.eq.s32.totalorder %s19, 0
      %p61 = por %p59, %p60
      %p62 = scmp.ne.s32.totalorder %s48, %s49
      %p63 = scmp.eq.s32.totalorder %s20, 1
      %p64 = por %p62, %p63
      %p66 = scmp.ne.s32.totalorder %s49, %s65
      %p67 = scmp.eq.s32.totalorder %s20, 0
      %p68 = por %p66, %p67
      %s69 = ssub.s32 %s23, %s32
      %p70 = scmp.eq.s32.totalorder %s69, 0
      %s72 = sadd.s32 %s71, 1
      %s73 = scalar_select %p70, %s71, %s72
      %p76 = pneg %p70
      %p77 = scmp.eq.s32.totalorder %s14, 1
      %p78 = por %p76, %p77
      %p79 = scmp.ne.s32.totalorder %s71, %s74
      %p80 = scmp.eq.s32.totalorder %s14, 0
      %p81 = por %p79, %p80
      %p82 = scmp.ne.s32.totalorder %s71, %s74
      %p83 = scmp.eq.s32.totalorder %s19, 1
      %p84 = por %p82, %p83
      %p85 = scmp.ne.s32.totalorder %s74, %s75
      %p86 = scmp.eq.s32.totalorder %s19, 0
      %p87 = por %p85, %p86
      %p88 = scmp.ne.s32.totalorder %s74, %s75
      %p89 = scmp.eq.s32.totalorder %s20, 1
      %p90 = por %p88, %p89
      %p92 = scmp.ne.s32.totalorder %s75, %s91
      %p93 = scmp.eq.s32.totalorder %s20, 0
      %p94 = por %p92, %p93
      %s95 = ssub.s32 %s23, %s32
      %p96 = scmp.eq.s32.totalorder %s95, 0
      %s98 = sadd.s32 %s97, 1
      %s99 = scalar_select %p96, %s97, %s98
      %p102 = pneg %p96
      %p103 = scmp.eq.s32.totalorder %s14, 1
      %p104 = por %p102, %p103
      %p105 = scmp.ne.s32.totalorder %s97, %s100
      %p106 = scmp.eq.s32.totalorder %s14, 0
      %p107 = por %p105, %p106
      %p108 = scmp.ne.s32.totalorder %s97, %s100
      %p109 = scmp.eq.s32.totalorder %s19, 1
      %p110 = por %p108, %p109
      %p111 = scmp.ne.s32.totalorder %s100, %s101
      %p112 = scmp.eq.s32.totalorder %s19, 0
      %p113 = por %p111, %p112
      %p114 = scmp.ne.s32.totalorder %s100, %s101
      %p115 = scmp.eq.s32.totalorder %s20, 1
      %p116 = por %p114, %p115
      %p118 = scmp.ne.s32.totalorder %s101, %s117
      %p119 = scmp.eq.s32.totalorder %s20, 0
      %p120 = por %p118, %p119
      %s121 = ssub.s32 %s23, %s32
      %p122 = scmp.eq.s32.totalorder %s121, 0
      %s124 = sadd.s32 %s123, 1
      %s125 = scalar_select %p122, %s123, %s124
      %p128 = pneg %p122
      %p129 = scmp.eq.s32.totalorder %s14, 1
      %p130 = por %p128, %p129
      %p131 = scmp.ne.s32.totalorder %s123, %s126
      %p132 = scmp.eq.s32.totalorder %s14, 0
      %p133 = por %p131, %p132
      %p134 = scmp.ne.s32.totalorder %s123, %s126
      %p135 = scmp.eq.s32.totalorder %s19, 1
      %p136 = por %p134, %p135
      %p137 = scmp.ne.s32.totalorder %s126, %s127
      %p138 = scmp.eq.s32.totalorder %s19, 0
      %p139 = por %p137, %p138
      %p140 = scmp.ne.s32.totalorder %s126, %s127
      %p141 = scmp.eq.s32.totalorder %s20, 1
      %p142 = por %p140, %p141
      %p144 = scmp.ne.s32.totalorder %s127, %s143
      %p145 = scmp.eq.s32.totalorder %s20, 0
      %p146 = por %p144, %p145
      %s148 = sadd.s32 %s147, 1
      %p151 = scmp.eq.s32.totalorder %s14, 1
      %p152 = scmp.ne.s32.totalorder %s147, %s149
      %p153 = scmp.eq.s32.totalorder %s14, 0
      %p154 = por %p152, %p153
      %p155 = scmp.ne.s32.totalorder %s147, %s149
      %p156 = scmp.eq.s32.totalorder %s19, 1
      %p157 = por %p155, %p156
      %p158 = scmp.ne.s32.totalorder %s149, %s150
      %p159 = scmp.eq.s32.totalorder %s19, 0
      %p160 = por %p158, %p159
      %p161 = scmp.ne.s32.totalorder %s149, %s150
      %p162 = scmp.eq.s32.totalorder %s20, 1
      %p163 = por %p161, %p162
      %p165 = scmp.ne.s32.totalorder %s150, %s164
      %p166 = scmp.eq.s32.totalorder %s20, 0
      %p167 = por %p165, %p166
      %s168 = ssub.s32 %s21, %s40
      %s169 = ssub.s32 %s22, %s36
      %s170 = sor.u32 %s168, %s169
      %p171 = scmp.eq.s32.totalorder %s170, 0
      %s173 = sadd.s32 %s172, 1
      %s174 = scalar_select %p171, %s172, %s173
      %p177 = pneg %p171
      %p178 = scmp.eq.s32.totalorder %s14, 1
      %p179 = por %p177, %p178
      %p180 = scmp.ne.s32.totalorder %s172, %s175
      %p181 = scmp.eq.s32.totalorder %s14, 0
      %p182 = por %p180, %p181
      %p183 = scmp.ne.s32.totalorder %s172, %s175
      %p184 = scmp.eq.s32.totalorder %s19, 1
      %p185 = por %p183, %p184
      %p186 = scmp.ne.s32.totalorder %s175, %s176
      %p187 = scmp.eq.s32.totalorder %s19, 0
      %p188 = por %p186, %p187
      %p189 = scmp.ne.s32.totalorder %s175, %s176
      %p190 = scmp.eq.s32.totalorder %s20, 1
      %p191 = por %p189, %p190
      %p193 = scmp.ne.s32.totalorder %s176, %s192
      %p194 = scmp.eq.s32.totalorder %s20, 0
      %p195 = por %p193, %p194
      %p196 = scmp.le.s32.totalorder 1, %s14
      %p197 = scmp.lt.s32.totalorder %s14, 3
      %p198 = pnand %p196, %p197
      %p199 = pneg %p198
      // Predicated region
      $region9: #{tpu_custom_call.1} parent=5 // pred_check
        _
      $region10: #{tpu_custom_call.1} parent=5 // pred_check_branch
        %201 = sbr.rel (%p198) target = $region12
      $region11: #{tpu_custom_call.1} parent=5 // pred_region
        %s202 = ssub.s32 %s14, 1
        // Predicated region
        $region13: #{tpu_custom_call.1} parent=11 // pred_check
          %p203 = pneg %p87
        $region14: #{tpu_custom_call.1} parent=11 // pred_check_branch
          %205 = sbr.rel (%p203) target = $region16
        $region15: #{tpu_custom_call.1} parent=11 // pred_region
          %s206 = smul.u32 2, %s26
          %p207 = scmp.lt.s32.totalorder %s206, 1
          %s208 = scalar_select %p207, %s206, 1
          %s209 = smul.addr %s208, 4
          %s210 = scalar_lea.vmem %s1, %s209
          %s211 = smul.u32 2, %s26
        $region16: #{tpu_custom_call.1} parent=11 // pred_fallthru
          _
        // Predicated region
        $region17: #{tpu_custom_call.1} parent=11 // pred_check
          %p212 = pneg %p113
        $region18: #{tpu_custom_call.1} parent=11 // pred_check_branch
          %214 = sbr.rel (%p212) target = $region20
        $region19: #{tpu_custom_call.1} parent=11 // pred_region
          %s215 = smul.u32 2, %s26
          %p216 = scmp.lt.s32.totalorder %s215, 1
          %s217 = scalar_select %p216, %s215, 1
          %s218 = smul.addr %s217, 8
          %s219 = scalar_lea.vmem %s2, %s218
          %s220 = smul.u32 2, %s26
        $region20: #{tpu_custom_call.1} parent=11 // pred_fallthru
          _
        // Predicated region
        $region21: #{tpu_custom_call.1} parent=11 // pred_check
          %p221 = pneg %p139
        $region22: #{tpu_custom_call.1} parent=11 // pred_check_branch
          %223 = sbr.rel (%p221) target = $region24
        $region23: #{tpu_custom_call.1} parent=11 // pred_region
          %p224 = scmp.lt.s32.totalorder %s26, 0
          %s225 = scalar_select %p224, %s26, 0
          %s226 = smul.addr %s225, 2
          %s227 = scalar_lea.vmem %s3, %s226
        $region24: #{tpu_custom_call.1} parent=11 // pred_fallthru
          _
        // Predicated region
        $region25: #{tpu_custom_call.1} parent=11 // pred_check
          %p228 = pneg %p160
        $region26: #{tpu_custom_call.1} parent=11 // pred_check_branch
          %230 = sbr.rel (%p228) target = $region28
        $region27: #{tpu_custom_call.1} parent=11 // pred_region
          _
        $region28: #{tpu_custom_call.1} parent=11 // pred_fallthru
          _
      $region12: #{tpu_custom_call.1} parent=5 // pred_fallthru
        _
      %p231 = scmp.lt.s32.totalorder %s14, 2
      // Predicated region
      $region29: #{tpu_custom_call.1} parent=5 // pred_check
        %p232 = pneg %p231
      $region30: #{tpu_custom_call.1} parent=5 // pred_check_branch
        %234 = sbr.rel (%p232) target = $region32
      $region31: #{tpu_custom_call.1} parent=5 // pred_region
        // Predicated region
        $region33: #{tpu_custom_call.1} parent=31 // pred_check
          %p235 = pneg %p55
        $region34: #{tpu_custom_call.1} parent=31 // pred_check_branch
          %237 = sbr.rel (%p235) target = $region36
        $region35: #{tpu_custom_call.1} parent=31 // pred_region
          %s238 = smul.u32 2, %s22
          %p239 = scmp.lt.s32.totalorder %s21, 1
          %s240 = scalar_select %p239, %s21, 1
          %p241 = scmp.lt.s32.totalorder %s238, 1
          %s242 = scalar_select %p241, %s238, 1
          %s243 = smul.addr %s240, 2
          %s244 = sadd.s32 %s242, %s243
          %s245 = smul.addr %s244, 4
          %s246 = scalar_lea.vmem %s0, %s245
          %s247 = smul.u32 2, %s22
        $region36: #{tpu_custom_call.1} parent=31 // pred_fallthru
          _
      $region32: #{tpu_custom_call.1} parent=5 // pred_fallthru
        _
      %p248 = scmp.le.s32.totalorder 1, %s14
      %p249 = scmp.lt.s32.totalorder %s14, 3
      %p250 = pnand %p248, %p249
      %p251 = pneg %p250
      // Predicated region
      $region37: #{tpu_custom_call.1} parent=5 // pred_check
        _
      $region38: #{tpu_custom_call.1} parent=5 // pred_check_branch
        %253 = sbr.rel (%p250) target = $region40
      $region39: #{tpu_custom_call.1} parent=5 // pred_region
        %s254 = ssub.s32 %s14, 1
        %s255 = smul.u32 2, %s25
        %p256 = scmp.lt.s32.totalorder %s24, 1
        %s257 = scalar_select %p256, %s24, 1
        %p258 = scmp.lt.s32.totalorder %s255, 1
        %s259 = scalar_select %p258, %s255, 1
        %s260 = smul.addr %s257, 2
        %s261 = sadd.s32 %s259, %s260
        %s262 = smul.addr %s261, 4
        %s263 = scalar_lea.vmem %s0, %s262
        %p264 = pneg %p61
        %p265 = pneg %p58
        %s266 = smul.u32 2, %s26
        %p267 = scmp.lt.s32.totalorder %s266, 1
        %s268 = scalar_select %p267, %s266, 1
        %s269 = smul.addr %s268, 4
        %s270 = scalar_lea.vmem %s1, %s269
        %p271 = pneg %p87
        %p272 = pneg %p84
        %s273 = smul.u32 2, %s26
        %p274 = scmp.lt.s32.totalorder %s273, 1
        %s275 = scalar_select %p274, %s273, 1
        %s276 = smul.addr %s275, 8
        %s277 = scalar_lea.vmem %s2, %s276
        %p278 = pneg %p113
        %p279 = pneg %p110
        %p280 = scmp.lt.s32.totalorder %s26, 0
        %s281 = scalar_select %p280, %s26, 0
        %s282 = smul.addr %s281, 2
        %s283 = scalar_lea.vmem %s3, %s282
        %p284 = pneg %p139
        %p285 = pneg %p136
        %p286 = pneg %p160
        %p287 = pneg %p157
        %p288 = pneg %p188
        %p289 = pneg %p185
        %s290 = sand.u32 %s175, 1
        %s291 = scalar_lea.sflag [#allocation4], %s290
        %s292 = sand.u32 %s175, 1
        %s293 = smul.addr %s292, 8
        %s294 = scalar_lea.vmem [#allocation3], %s293
        %s295 = smul.u32 2, %s25
        %p296 = scmp.lt.s32.totalorder %s24, 1
        %s297 = scalar_select %p296, %s24, 1
        %p298 = scmp.lt.s32.totalorder %s295, 1
        %s299 = scalar_select %p298, %s295, 1
        %s300 = smul.addr %s297, 2
        %s301 = sadd.s32 %s299, %s300
        %s302 = smul.addr %s301, 4
        %s303 = scalar_lea.vmem %s0, %s302
        %s304 = smul.u32 2, %s25
        %s305 = smul.u32 2, %s26
        %p306 = scmp.lt.s32.totalorder %s305, 1
        %s307 = scalar_select %p306, %s305, 1
        %s308 = smul.addr %s307, 4
        %s309 = scalar_lea.vmem %s1, %s308
        %s310 = smul.u32 2, %s26
        %s311 = smul.u32 2, %s26
        %p312 = scmp.lt.s32.totalorder %s311, 1
        %s313 = scalar_select %p312, %s311, 1
        %s314 = smul.addr %s313, 8
        %s315 = scalar_lea.vmem %s2, %s314
        %s316 = smul.u32 2, %s26
        %p317 = scmp.lt.s32.totalorder %s26, 0
        %s318 = scalar_select %p317, %s26, 0
        %s319 = smul.addr %s318, 2
        %s320 = scalar_lea.vmem %s3, %s319
        %s321 = smul.u32 2, %s25
        %p323 = scmp.eq.s32.totalorder %s26, 0
        // Predicated region
        $region41: #{tpu_custom_call.1} parent=39 // pred_check
          %p324 = pneg %p323
        $region42: #{tpu_custom_call.1} parent=39 // pred_check_branch
          %326 = sbr.rel (%p324) target = $region44
        $region43: #{tpu_custom_call.1} parent=39 // pred_region
          %327 = vst [vmem:[#allocation2] sm:$0xff] 0.0
        $region44: #{tpu_custom_call.1} parent=39 // pred_fallthru
          _
        %v328 = vld [vmem:[%s303] sm:$0xff]
        %v330 = vcombine.high %v328, %v328
        %v332 = vpack.c.bf16 %v328, %v328
        %v333 = vpack.c.bf16 %v330, %v330
        %v334 = vld [vmem:[%s309] sm:$0xf]
        %v335 = vld [vmem:[%s309 + $0x4] sm:$0xf]
        %v336 = vld [vmem:[%s315] sm:$0xff]
        %v337 = vld [vmem:[%s315 + $0x8] sm:$0xff]
        %339 = vset.pattern.permute.xlu0 0
        %340 = vperm.xlu0 %339, %v336
        %v341 = vpop.permute.xlu0 %340
        %344 = vset.pattern.permute.xlu0 0
        %345 = vperm.xlu0 %344, %v337
        %v346 = vpop.permute.xlu0 %345
        %v350 = vunpack.c.l.b16 %v334
        %v351 = vunpack.c.l.b16 %v335
        %v352 = vpack.c.b16 %v351, %v350
        %vm353 = vcmask 31744
        %v355 = vsel %vm353, %v352, 0
        %vm357 = vcmask 1041408
        %v359 = vsel %vm357, %v332, 0
        %v362 = vsel %vm357, %v333, 0
        %364 = vmatprep.subr.bf16.mxu0 %v362
        %365 = vmatpush1.bf16.msra.mxu0 %v359
        %366 = vmatprep.subr.bf16.mxu0 0
        %367 = vmatpush1.bf16.msra.mxu0 0
        %368 = vmatprep.subr.bf16.mxu0 0
        %369 = vmatpush1.bf16.msra.mxu0 0
        %370 = vmatprep.subr.bf16.mxu0 0
        %371 = vmatpush1.bf16.msra.mxu0 0
        %372 = vmatprep.subr.bf16.mxu0 0
        %373 = vmatpush1.bf16.msra.mxu0 0
        %374 = vmatprep.subr.bf16.mxu0 0
        %375 = vmatpush1.bf16.msra.mxu0 0
        %376 = vmatprep.subr.bf16.mxu0 0
        %377 = vmatpush1.bf16.msra.mxu0 0
        %378 = vmatprep.subr.bf16.mxu0 0
        %379 = vmatpush1.bf16.msra.mxu0 0
        %380 = vmatprep.subr.bf16.mxu0 0
        %381 = vmatpush1.bf16.msra.mxu0 0
        %382 = vmatprep.subr.bf16.mxu0 0
        %383 = vmatpush1.bf16.msra.mxu0 0
        %384 = vmatprep.subr.bf16.mxu0 0
        %385 = vmatpush1.bf16.msra.mxu0 0
        %386 = vmatprep.subr.bf16.mxu0 0
        %387 = vmatpush1.bf16.msra.mxu0 0
        %388 = vmatprep.subr.bf16.mxu0 0
        %389 = vmatpush1.bf16.msra.mxu0 0
        %390 = vmatprep.subr.bf16.mxu0 0
        %391 = vmatpush1.bf16.msra.mxu0 0
        %392 = vmatprep.subr.bf16.mxu0 0
        %393 = vmatpush1.bf16.msra.mxu0 0
        %394 = vmatprep.subr.bf16.mxu0 0
        %395 = vmatpush1.bf16.msra.mxu0 0
        %396 = vmatprep.mubr.bf16.mxu0 0
        %397 = vmatmul.mubr.bf16.gmra.mrb[0].mxu0 %v355
        %v398 = vpop.f32.mrb[0].mxu0
        %v399 = vadd.f32 %v341, %v398
        %v400 = vpop.f32.mrb[0].mxu0
        %v401 = vadd.f32 %v341, %v400
        %v402 = vpop.f32.mrb[0].mxu0
        %v403 = vadd.f32 %v346, %v402
        %v404 = vpop.f32.mrb[0].mxu0
        %v405 = vadd.f32 %v346, %v404
        %406 = vdwg.mxu0
        %v407 = vmul.f32 %v399, 0.5
        %v408 = vmul.f32 %v401, 0.5
        %v409 = vmul.f32 %v403, 0.5
        %v410 = vmul.f32 %v405, 0.5
        %v411 = vmul.f32 %v399, 0.70710677
        %v412 = vmul.f32 %v401, 0.70710677
        %v413 = vmul.f32 %v403, 0.70710677
        %v414 = vmul.f32 %v405, 0.70710677
        %v415 = verf.f32.pop %v411
        %v416 = verf.f32.pop %v412
        %v417 = verf.f32.pop %v413
        %v418 = verf.f32.pop %v414
        %v419 = vadd.f32 %v415, 1.0
        %v420 = vadd.f32 %v416, 1.0
        %v421 = vadd.f32 %v417, 1.0
        %v422 = vadd.f32 %v418, 1.0
        %v423 = vmul.f32 %v407, %v419
        %v424 = vmul.f32 %v408, %v420
        %v425 = vmul.f32 %v409, %v421
        %v426 = vmul.f32 %v410, %v422
        %v427 = vld [vmem:[#allocation2] sm:$0xff]
        %v428 = vld [vmem:[%s320] sm:$0x3]
        %v429 = vpack.c.bf16 %v425, %v423
        %v430 = vpack.c.bf16 %v426, %v424
        %vm431 = vcmask 130048
        %v433 = vsel %vm431, %v428, 0
        %435 = vmatprep.subr.bf16.mxu0 %v430
        %436 = vmatpush1.bf16.msra.mxu0 %v429
        %437 = vmatprep.subr.bf16.mxu0 0
        %438 = vmatpush1.bf16.msra.mxu0 0
        %439 = vmatprep.subr.bf16.mxu0 0
        %440 = vmatpush1.bf16.msra.mxu0 0
        %441 = vmatprep.subr.bf16.mxu0 0
        %442 = vmatpush1.bf16.msra.mxu0 0
        %443 = vmatprep.subr.bf16.mxu0 0
        %444 = vmatpush1.bf16.msra.mxu0 0
        %445 = vmatprep.subr.bf16.mxu0 0
        %446 = vmatpush1.bf16.msra.mxu0 0
        %447 = vmatprep.subr.bf16.mxu0 0
        %448 = vmatpush1.bf16.msra.mxu0 0
        %449 = vmatprep.subr.bf16.mxu0 0
        %450 = vmatpush1.bf16.msra.mxu0 0
        %451 = vmatprep.subr.bf16.mxu0 0
        %452 = vmatpush1.bf16.msra.mxu0 0
        %453 = vmatprep.subr.bf16.mxu0 0
        %454 = vmatpush1.bf16.msra.mxu0 0
        %455 = vmatprep.subr.bf16.mxu0 0
        %456 = vmatpush1.bf16.msra.mxu0 0
        %457 = vmatprep.subr.bf16.mxu0 0
        %458 = vmatpush1.bf16.msra.mxu0 0
        %459 = vmatprep.subr.bf16.mxu0 0
        %460 = vmatpush1.bf16.msra.mxu0 0
        %461 = vmatprep.subr.bf16.mxu0 0
        %462 = vmatpush1.bf16.msra.mxu0 0
        %463 = vmatprep.subr.bf16.mxu0 0
        %464 = vmatpush1.bf16.msra.mxu0 0
        %465 = vmatprep.subr.bf16.mxu0 0
        %466 = vmatpush1.bf16.msra.mxu0 0
        %467 = vmatprep.mubr.bf16.mxu0 0
        %468 = vmatmul.mubr.bf16.gmra.mrb[0].mxu0 %v433
        %v469 = vpop.f32.mrb[0].mxu0
        %v470 = vadd.f32 0.0, %v469
        %v471 = vpop.f32.mrb[0].mxu0
        %v472 = vadd.f32 0.0, %v471
        %v473 = vpop.f32.mrb[0].mxu0
        %v474 = vpop.f32.mrb[0].mxu0
        %475 = vdwg.mxu0
        %v478 = vcombine.low %v470, %v472
        %v480 = vadd.f32 %v427, %v478
        %481 = vst [vmem:[#allocation2] sm:$0xff] %v480
        // Predicated region
        $region45: #{tpu_custom_call.1} parent=39 // pred_check
          %p482 = pneg %p323
        $region46: #{tpu_custom_call.1} parent=39 // pred_check_branch
          %484 = sbr.rel (%p482) target = $region48
        $region47: #{tpu_custom_call.1} parent=39 // pred_region
          %v485 = vld [vmem:[#allocation2] sm:$0xff]
          %v486 = vld [vmem:[%s4] sm:$0xf]
          %488 = vset.pattern.permute.xlu0 0
          %489 = vperm.xlu0 %488, %v486
          %v490 = vpop.permute.xlu0 %489
          %v492 = vunpack.c.l.s4 839922192
          %v493 = vunpack.c.0.s8 %v492
          %v494 = vlaneseq
          %v495 = vshrl.u32 %v494, 7
          %v496 = vsub.s32 %v493, %v495
          %v497 = vrot.slane %v490, %v496
          %v499 = vadd.f32 %v485, %v497
          %500 = vst [vmem:[%s294] sm:$0xff] %v499
        $region48: #{tpu_custom_call.1} parent=39 // pred_fallthru
          _
        %s501 = sand.u32 %s175, 1
        %s502 = scalar_lea.sflag [#allocation4], %s501
        %s503 = sand.u32 %s175, 1
        %s504 = smul.addr %s503, 8
        %s505 = scalar_lea.vmem [#allocation3], %s504
        // Predicated region
        $region49: #{tpu_custom_call.1} parent=39 // pred_check
          %p506 = pneg %p185
        $region50: #{tpu_custom_call.1} parent=39 // pred_check_branch
          %508 = sbr.rel (%p506) target = $region52
        $region51: #{tpu_custom_call.1} parent=39 // pred_region
          %s509 = smul.u32 2, %s25
          %s511 = ssub.s32 128, 128
          %512 = vsyncadd %s502, %s511
          %s513 = smul.addr %s24, 2
          %s514 = sadd.s32 %s509, %s513
          %s515 = smul.addr %s514, 64
          %s516 = scalar_lea.hbm %s5, %s515
          %s518 = sshll.u32 %s505, 4
          %s519 = int_to_ptr.vmem [resolvable:$true] %s518
          %521 = dma.vmem_to_hbm [thread:$0]  %s519, 128, %s516, %s502
        $region52: #{tpu_custom_call.1} parent=39 // pred_fallthru
          _
      $region40: #{tpu_custom_call.1} parent=5 // pred_fallthru
        _
      %p522 = scmp.le.s32.totalorder 2, %s14
      // Predicated region
      $region53: #{tpu_custom_call.1} parent=5 // pred_check
        %p523 = pneg %p522
      $region54: #{tpu_custom_call.1} parent=5 // pred_check_branch
        %525 = sbr.rel (%p523) target = $region56
      $region55: #{tpu_custom_call.1} parent=5 // pred_region
        %s526 = ssub.s32 %s14, 2
        // Predicated region
        $region57: #{tpu_custom_call.1} parent=55 // pred_check
          %p527 = pneg %p191
        $region58: #{tpu_custom_call.1} parent=55 // pred_check_branch
          %529 = sbr.rel (%p527) target = $region60
        $region59: #{tpu_custom_call.1} parent=55 // pred_region
          %s530 = sand.u32 %s176, 1
          %s531 = scalar_lea.sflag [#allocation4], %s530
          %s532 = sand.u32 %s176, 1
          %s533 = smul.addr %s532, 8
          %s534 = scalar_lea.vmem [#allocation3], %s533
          %535 = dma.done %s531, 128
        $region60: #{tpu_custom_call.1} parent=55 // pred_fallthru
          _
      $region56: #{tpu_custom_call.1} parent=5 // pred_fallthru
        _
    $region6: #{tpu_custom_call.1} parent=1 // loop_footer
      %s18 = sadd.s32 1, %s14
    $region7: #{tpu_custom_call.1} parent=1 // loop_footer_branch
      %13 = sbr.rel target = $region3
    $region8: #{tpu_custom_call.1} parent=1 // loop_exit
      _
    %536 = vsyncpa [#allocation4], 1
    %s537 = scalar_lea.sflag [#allocation4], 1
    %538 = vsyncpa %s537, 1

</llo_original>
